<compile_context>
chip_gen: v7x
topology: tpu7x:2x2x1
jax: 0.10.0
libtpu: 0.0.40
codegen_flags: <defaults>
</compile_context>

<pallas_src>
import functools

import jax
import jax.numpy as jnp
from jax import lax
from jax.experimental import pallas as pl
from jax.experimental.pallas import tpu as pltpu

EPS = 1e-3
_VMEM_LIMIT = 32 * 1024 * 1024  # fits comfortably on v5e/v6e/v7x scoped VMEM


def _round_up(x, m):
    return (x + m - 1) // m * m


# ---------------------------------------------------------------------------
# Pass 1: per-channel sum / sum-of-squares of x = inputs @ W (global BN stats).
# ---------------------------------------------------------------------------
def _stats_kernel(x_ref, w_ref, stats_ref, *, compute_dtype):
    a = x_ref[...].astype(compute_dtype)
    b = w_ref[...].astype(compute_dtype)
    x = jnp.dot(a, b, preferred_element_type=jnp.float32)          # (TM, U_pad)

    @pl.when(pl.program_id(0) == 0)
    def _():
        stats_ref[...] = jnp.zeros_like(stats_ref)

    s = jnp.concatenate(
        [jnp.sum(x, axis=0, keepdims=True),
         jnp.sum(x * x, axis=0, keepdims=True)], axis=0)            # (2, U_pad)
    stats_ref[...] += s


# ---------------------------------------------------------------------------
# Pass 2: per-pillar max of relu(BN(x)), accumulated across point tiles.
# ---------------------------------------------------------------------------
def _pillar_max_kernel(x_ref, w_ref, scale_ref, bias_ref, inv_row_ref,
                       pmax_ref, *, compute_dtype):
    a = x_ref[...].astype(compute_dtype)
    b = w_ref[...].astype(compute_dtype)
    x = jnp.dot(a, b, preferred_element_type=jnp.float32)          # (TM, U_pad)
    xr = jnp.maximum(x * scale_ref[...] + bias_ref[...], 0.0)      # (TM, U_pad)

    p_pad, tm = pmax_ref.shape[0], xr.shape[0]
    pillar_iota = lax.broadcasted_iota(jnp.int32, (p_pad, tm), 0)
    member = (pillar_iota == inv_row_ref[...]).astype(jnp.float32)  # (P_pad, TM)

    # ReLU output >= 0, so 0 is a valid identity: masked max is just max(mask*xr).
    contrib = jnp.max(member[:, :, None] * xr[None, :, :], axis=1)  # (P_pad, U_pad)

    @pl.when(pl.program_id(0) == 0)
    def _():
        pmax_ref[...] = jnp.zeros_like(pmax_ref)

    pmax_ref[...] = jnp.maximum(pmax_ref[...], contrib)


# ---------------------------------------------------------------------------
# Pass 3: recompute relu(BN(x)), gather per-pillar max back via one-hot MXU
# matmul, single lane-dense concatenated store.
# ---------------------------------------------------------------------------
def _output_kernel(x_ref, w_ref, scale_ref, bias_ref, inv_col_ref, pmax_ref,
                   out_ref, *, last_vfe, compute_dtype):
    a = x_ref[...].astype(compute_dtype)
    b = w_ref[...].astype(compute_dtype)
    x = jnp.dot(a, b, preferred_element_type=jnp.float32)          # (TM, U_pad)
    xr = jnp.maximum(x * scale_ref[...] + bias_ref[...], 0.0)      # (TM, U_pad)

    tm, p_pad = xr.shape[0], pmax_ref.shape[0]
    onehot = (lax.broadcasted_iota(jnp.int32, (tm, p_pad), 1)
              == inv_col_ref[...]).astype(compute_dtype)            # (TM, P_pad)
    # Each one-hot row has exactly one 1 -> this matmul IS the gather (exact).
    x_max = jnp.dot(onehot, pmax_ref[...].astype(compute_dtype),
                    preferred_element_type=jnp.float32)             # (TM, U_pad)

    if last_vfe:
        out_ref[...] = x_max
    else:
        out_ref[...] = jnp.concatenate([xr, x_max], axis=1)         # (TM, 2*U_pad)


# ---------------------------------------------------------------------------
# Wrapper
# ---------------------------------------------------------------------------
def pfn_layer(inputs, unq_inv, num_pillars, w, gamma, beta, *,
              last_vfe=False, tile_m=256, compute_dtype=jnp.float32):
    """inputs: (N, Cin) f32, unq_inv: (N,) int, w: (units, Cin) as nn.Linear."""
    n, c_in = inputs.shape
    units = w.shape[0]

    u_pad = _round_up(units, 128)                 # lane-dense channels
    n_pad = _round_up(n, tile_m)                  # even tiling of the point axis
    p_pad = _round_up(num_pillars + 1, 8)         # +1 dummy pillar for padded rows

    f32 = jnp.float32
    x_p = jnp.pad(inputs.astype(f32), ((0, n_pad - n), (0, 0)))
    inv = jnp.pad(unq_inv.astype(jnp.int32), (0, n_pad - n),
                  constant_values=num_pillars)    # padded rows -> dummy pillar
    inv_col = inv.reshape(n_pad, 1)
    inv_row = inv.reshape(1, n_pad)
    w_t = jnp.pad(w.astype(f32).T, ((0, 0), (0, u_pad - units)))    # (Cin, U_pad)
    gamma_p = jnp.pad(gamma.astype(f32).reshape(1, units),
                      ((0, 0), (0, u_pad - units)))
    beta_p = jnp.pad(beta.astype(f32).reshape(1, units),
                     ((0, 0), (0, u_pad - units)))

    grid = (n_pad // tile_m,)
    x_spec = pl.BlockSpec((tile_m, c_in), lambda i: (i, 0))
    w_spec = pl.BlockSpec((c_in, u_pad), lambda i: (0, 0))
    chan_spec = pl.BlockSpec((1, u_pad), lambda i: (0, 0))

    # ---- Pass 1: global BatchNorm statistics (accumulated over tiles) ----
    stats = pl.pallas_call(
        functools.partial(_stats_kernel, compute_dtype=compute_dtype),
        out_shape=jax.ShapeDtypeStruct((2, u_pad), f32),
        grid=grid,
        in_specs=[x_spec, w_spec],
        out_specs=pl.BlockSpec((2, u_pad), lambda i: (0, 0)),
        compiler_params=pltpu.CompilerParams(
            dimension_semantics=("arbitrary",), vmem_limit_bytes=_VMEM_LIMIT),
    )(x_p, w_t)

    # Fold BN (biased batch variance, eps=1e-3) into per-channel scale/bias.
    # Tiny (1, U_pad) math; zero-padded rows/channels contribute 0 to the sums,
    # so dividing by the real N keeps the statistics exact.
    mean = stats[0:1] / n
    var = stats[1:2] / n - mean * mean
    scale = gamma_p / jnp.sqrt(var + EPS)
    bias = beta_p - mean * scale

    # ---- Pass 2: per-pillar max of relu(BN(linear(x))) ----
    pmax = pl.pallas_call(
        functools.partial(_pillar_max_kernel, compute_dtype=compute_dtype),
        out_shape=jax.ShapeDtypeStruct((p_pad, u_pad), f32),
        grid=grid,
        in_specs=[x_spec, w_spec, chan_spec, chan_spec,
                  pl.BlockSpec((1, tile_m), lambda i: (0, i))],
        out_specs=pl.BlockSpec((p_pad, u_pad), lambda i: (0, 0)),
        compiler_params=pltpu.CompilerParams(
            dimension_semantics=("arbitrary",), vmem_limit_bytes=_VMEM_LIMIT),
    )(x_p, w_t, scale, bias, inv_row)

    # ---- Pass 3: gather-back + concatenated lane-dense output ----
    out_cols = u_pad if last_vfe else 2 * u_pad
    out_full = pl.pallas_call(
        functools.partial(_output_kernel, last_vfe=last_vfe,
                          compute_dtype=compute_dtype),
        out_shape=jax.ShapeDtypeStruct((n_pad, out_cols), f32),
        grid=grid,
        in_specs=[x_spec, w_spec, chan_spec, chan_spec,
                  pl.BlockSpec((tile_m, 1), lambda i: (i, 0)),
                  pl.BlockSpec((p_pad, u_pad), lambda i: (0, 0))],
        out_specs=pl.BlockSpec((tile_m, out_cols), lambda i: (i, 0)),
        compiler_params=pltpu.CompilerParams(
            dimension_semantics=("parallel",), vmem_limit_bytes=_VMEM_LIMIT),
    )(x_p, w_t, scale, bias, inv_col, pmax)

    if last_vfe:
        return out_full[:n, :units]
    return jnp.concatenate(
        [out_full[:n, :units], out_full[:n, u_pad:u_pad + units]], axis=1)


# ---------------------------------------------------------------------------
# Pure-JAX reference (mirrors the PyTorch module in training mode)
# ---------------------------------------------------------------------------
def _reference(inputs, unq_inv, w, gamma, beta, num_pillars, last_vfe=False):
    x = inputs @ w.T
    mean = x.mean(axis=0, keepdims=True)
    var = ((x - mean) ** 2).mean(axis=0, keepdims=True)   # biased variance
    xn = (x - mean) / jnp.sqrt(var + EPS) * gamma + beta
    xr = jnp.maximum(xn, 0.0)
    feat_max = jax.ops.segment_max(xr, unq_inv, num_segments=num_pillars)
    x_max = feat_max[unq_inv]
    return x_max if last_vfe else jnp.concatenate([xr, x_max], axis=1)


if __name__ == "__main__":
    key = jax.random.PRNGKey(0)
    k1, k2, k3, k4, k5 = jax.random.split(key, 5)

    N = 1000          # points (padded to 1024 -> 4 tiles of 256 internally)
    C_IN = 10         # decorated point feature dim (PointPillars-style)
    C_OUT = 64        # PFNLayer out_channels (last_layer=False -> units = 32)
    P = 32            # number of pillars
    units = C_OUT // 2

    inputs = jax.random.normal(k1, (N, C_IN), dtype=jnp.float32)
    unq_inv = jax.random.randint(k2, (N,), 0, P, dtype=jnp.int32)
    # nn.Linear(in, units, bias=False) weight: (units, in)
    w = jax.random.normal(k3, (units, C_IN), dtype=jnp.float32) * 0.1
    # BatchNorm1d affine params (deterministic, nontrivial)
    gamma = 1.0 + 0.1 * jax.random.normal(k4, (units,), dtype=jnp.float32)
    beta = 0.1 * jax.random.normal(k5, (units,), dtype=jnp.float32)

    out = pfn_layer(inputs, unq_inv, P, w, gamma, beta, last_vfe=False)
    out = jax.block_until_ready(out)

    ref = _reference(inputs, unq_inv, w, gamma, beta, P, last_vfe=False)
    assert out.shape == (N, C_OUT), out.shape
    err = float(jnp.max(jnp.abs(out - ref)))
    assert err < 2e-4, err

    print("KERNEL_OK")
</pallas_src>

<mosaic_0001>
module attributes {stable_mosaic.version = 11 : i64} {
  func.func @_stats_kernel(%arg0: i32, %arg1: memref<256x10xf32, #tpu.memory_space<vmem>>, %arg2: memref<10x128xf32, #tpu.memory_space<vmem>>, %arg3: memref<2x128xf32, #tpu.memory_space<vmem>>) attributes {dimension_semantics = [#tpu.dimension_semantics<arbitrary>], iteration_bounds = array<i64: 4>, scalar_prefetch = 0 : i64, scratch_operands = 0 : i64, tpu.core_type = #tpu.core_type<tc>, window_params = [{transform_indices = @transform_0, window_bounds = array<i64: 256, 10>}, {pipeline_mode = #tpu.pipeline_mode<synchronous>, transform_indices = @transform_1, window_bounds = array<i64: 10, 128>}, {pipeline_mode = #tpu.pipeline_mode<synchronous>, transform_indices = @transform_2, window_bounds = array<i64: 2, 128>}]} {
    %c0 = arith.constant 0 : index
    %c0_0 = arith.constant 0 : index
    %0 = vector.load %arg1[%c0, %c0_0] : memref<256x10xf32, #tpu.memory_space<vmem>>, vector<256x10xf32>
    %c0_1 = arith.constant 0 : index
    %c0_2 = arith.constant 0 : index
    %1 = vector.load %arg2[%c0_1, %c0_2] : memref<10x128xf32, #tpu.memory_space<vmem>>, vector<10x128xf32>
    %cst = arith.constant dense<0.000000e+00> : vector<256x128xf32>
    %2 = tpu.matmul %0, %1, %cst {dimension_numbers = #tpu.dot_dimension_numbers<[1], [0], [0], [1], [0, 0, 1, 1], [], []>} : vector<256x10xf32>, vector<10x128xf32>, vector<256x128xf32> -> vector<256x128xf32>
    %c0_i32 = arith.constant 0 : i32
    %3 = arith.cmpi eq, %arg0, %c0_i32 : i32
    %4 = arith.extui %3 : i1 to i32
    %c0_i32_3 = arith.constant 0 : i32
    %5 = arith.cmpi ne, %4, %c0_i32_3 : i32
    scf.if %5 {
      %cst_10 = arith.constant 0.000000e+00 : f32
      %15 = vector.broadcast %cst_10 : f32 to vector<2x128xf32>
      %c0_11 = arith.constant 0 : index
      %c0_12 = arith.constant 0 : index
      %16 = vector.load %arg3[%c0_11, %c0_12] : memref<2x128xf32, #tpu.memory_space<vmem>>, vector<2x128xf32>
      tpu.vector_store %arg3[%c0_11, %c0_12], %15 {strides = array<i32>} : memref<2x128xf32, #tpu.memory_space<vmem>>, vector<2x128xf32>,
    } else {
    }
    %cst_4 = arith.constant dense<0.000000e+00> : vector<128xf32>
    %6 = vector.multi_reduction <add>, %2, %cst_4 [0] : vector<256x128xf32> to vector<128xf32>
    %7 = vector.shape_cast %6 : vector<128xf32> to vector<1x128xf32>
    %8 = arith.mulf %2, %2 : vector<256x128xf32>
    %cst_5 = arith.constant dense<0.000000e+00> : vector<128xf32>
    %9 = vector.multi_reduction <add>, %8, %cst_5 [0] : vector<256x128xf32> to vector<128xf32>
    %10 = vector.shape_cast %9 : vector<128xf32> to vector<1x128xf32>
    %11 = tpu.concatenate %7, %10 in 0 : vector<1x128xf32>, vector<1x128xf32> -> vector<2x128xf32>
    %c0_6 = arith.constant 0 : index
    %c0_7 = arith.constant 0 : index
    %12 = vector.load %arg3[%c0_6, %c0_7] : memref<2x128xf32, #tpu.memory_space<vmem>>, vector<2x128xf32>
    %13 = arith.addf %12, %11 : vector<2x128xf32>
    %c0_8 = arith.constant 0 : index
    %c0_9 = arith.constant 0 : index
    %14 = vector.load %arg3[%c0_8, %c0_9] : memref<2x128xf32, #tpu.memory_space<vmem>>, vector<2x128xf32>
    tpu.vector_store %arg3[%c0_8, %c0_9], %13 {strides = array<i32>} : memref<2x128xf32, #tpu.memory_space<vmem>>, vector<2x128xf32>,
    return
  }
  func.func @transform_0(%arg0: i32) -> (i32, i32) {
    %c0_i32 = arith.constant 0 : i32
    %c0_i32_0 = arith.constant 0 : i32
    return %arg0, %c0_i32 : i32, i32
  }
  func.func @transform_1(%arg0: i32) -> (i32, i32) {
    %c0_i32 = arith.constant 0 : i32
    %c0_i32_0 = arith.constant 0 : i32
    %c0_i32_1 = arith.constant 0 : i32
    return %c0_i32, %c0_i32_0 : i32, i32
  }
  func.func @transform_2(%arg0: i32) -> (i32, i32) {
    %c0_i32 = arith.constant 0 : i32
    %c0_i32_0 = arith.constant 0 : i32
    %c0_i32_1 = arith.constant 0 : i32
    return %c0_i32, %c0_i32_0 : i32, i32
  }
}

</mosaic_0001>

<llo_original>
// kernel: tpu_custom_call.1
$region0: #{tpu_custom_call.1}
  #allocation0 [shape = 'u32[]', space=smem, size = 0x4, offset = 0x4, fixed_abs, tag = 'smem constant byte address 0x4 - core index']
  #allocation1 [shape = 'u32[144,128]{1,0:T(1,128)}', space=vmem, size = 0x12000, scoped, tag = 'internal scratch']
  %s0 = inlined_call_operand.vmem [shape: f32[1024,10], index: 0, kind: input, shape index: {}]
  %s1 = inlined_call_operand.vmem [shape: f32[10,128], index: 1, kind: input, shape index: {}]
  %s2 = inlined_call_operand.hbm [shape: f32[2,128], index: 2, kind: output, shape index: {}]
  %s3 = sld [smem:[#allocation0]]
  $region45: #{tpu_custom_call.1} parent=0
    _
  %s5 = ssub.s32 1, %s3
  %s6 = scalar_select 0, %s5, %s3
  $region1: #{tpu_custom_call.1} parent=0
    #allocation2 [shape = 'u8[1024]{0}', space=vmem, size = 0x400, scoped, tag = 'output window, operand 0, single buffered']
    #allocation3 [shape = 's32[2]{0}', space=sflag, size = 0x8, scoped, tag = 'scoped memory for tpu_custom_call.1']
    %7 = vsyncpa [#allocation3], 0
    loop: start=0, step=1, limit=6
    $region2: #{tpu_custom_call.1} parent=1 // loop_pre_header
      _
    $region3: #{tpu_custom_call.1} parent=1 // loop_header
      %s9 = sphi 0, %s13
      %p10 = scmp.ge.s32.totalorder %s9, 6
      %s19 = sphi 0, %s21
      %s22 = sphi 0, %s19
      %s23 = sphi 0, %s22
      %s39 = sphi 0, %s23
      %s43 = sphi 0, %s43
      %s45 = sphi 0, %s43
      %s46 = sphi 0, %s45
      %s60 = sphi 0, %s46
      %s64 = sphi 0, %s64
      %s66 = sphi 0, %s64
      %s67 = sphi 0, %s66
      %s81 = sphi 0, %s67
    $region4: #{tpu_custom_call.1} parent=1 // loop_header_branch
      %12 = sbr.rel (%p10) target = $region8
    $region5: #{tpu_custom_call.1} parent=1 // loop_body
      %s14 = ssub.s32 %s9, 1
      %s15 = ssub.s32 %s9, 2
      %s16 = sadd.s32 %s9, 1
      %s17 = ssub.s32 %s9, %s16
      %p18 = scmp.eq.s32.totalorder %s17, 0
      %s20 = sadd.s32 %s19, 1
      %s21 = scalar_select %p18, %s19, %s20
      %p24 = pneg %p18
      %p25 = scmp.eq.s32.totalorder %s9, 3
      %p26 = por %p24, %p25
      %p27 = scmp.ne.s32.totalorder %s19, %s22
      %p28 = scmp.eq.s32.totalorder %s9, 0
      %p29 = por %p27, %p28
      %p30 = scmp.ne.s32.totalorder %s19, %s22
      %p31 = scmp.eq.s32.totalorder %s14, 3
      %p32 = por %p30, %p31
      %p33 = scmp.ne.s32.totalorder %s22, %s23
      %p34 = scmp.eq.s32.totalorder %s14, 0
      %p35 = por %p33, %p34
      %p36 = scmp.ne.s32.totalorder %s22, %s23
      %p37 = scmp.eq.s32.totalorder %s15, 3
      %p38 = por %p36, %p37
      %p40 = scmp.ne.s32.totalorder %s23, %s39
      %p41 = scmp.eq.s32.totalorder %s15, 0
      %p42 = por %p40, %p41
      %s44 = sadd.s32 %s43, 1
      %p47 = scmp.eq.s32.totalorder %s9, 3
      %p48 = scmp.ne.s32.totalorder %s43, %s45
      %p49 = scmp.eq.s32.totalorder %s9, 0
      %p50 = por %p48, %p49
      %p51 = scmp.ne.s32.totalorder %s43, %s45
      %p52 = scmp.eq.s32.totalorder %s14, 3
      %p53 = por %p51, %p52
      %p54 = scmp.ne.s32.totalorder %s45, %s46
      %p55 = scmp.eq.s32.totalorder %s14, 0
      %p56 = por %p54, %p55
      %p57 = scmp.ne.s32.totalorder %s45, %s46
      %p58 = scmp.eq.s32.totalorder %s15, 3
      %p59 = por %p57, %p58
      %p61 = scmp.ne.s32.totalorder %s46, %s60
      %p62 = scmp.eq.s32.totalorder %s15, 0
      %p63 = por %p61, %p62
      %s65 = sadd.s32 %s64, 1
      %p68 = scmp.eq.s32.totalorder %s9, 3
      %p69 = scmp.ne.s32.totalorder %s64, %s66
      %p70 = scmp.eq.s32.totalorder %s9, 0
      %p71 = por %p69, %p70
      %p72 = scmp.ne.s32.totalorder %s64, %s66
      %p73 = scmp.eq.s32.totalorder %s14, 3
      %p74 = por %p72, %p73
      %p75 = scmp.ne.s32.totalorder %s66, %s67
      %p76 = scmp.eq.s32.totalorder %s14, 0
      %p77 = por %p75, %p76
      %p78 = scmp.ne.s32.totalorder %s66, %s67
      %p79 = scmp.eq.s32.totalorder %s15, 3
      %p80 = por %p78, %p79
      %p82 = scmp.ne.s32.totalorder %s67, %s81
      %p83 = scmp.eq.s32.totalorder %s15, 0
      %p84 = por %p82, %p83
      %p85 = scmp.le.s32.totalorder 1, %s9
      %p86 = scmp.lt.s32.totalorder %s9, 5
      %p87 = pnand %p85, %p86
      %p88 = pneg %p87
      // Predicated region
      $region9: #{tpu_custom_call.1} parent=5 // pred_check
        _
      $region10: #{tpu_custom_call.1} parent=5 // pred_check_branch
        %90 = sbr.rel (%p87) target = $region12
      $region11: #{tpu_custom_call.1} parent=5 // pred_region
        %s91 = ssub.s32 %s9, 1
        // Predicated region
        $region13: #{tpu_custom_call.1} parent=11 // pred_check
          %p92 = pneg %p56
        $region14: #{tpu_custom_call.1} parent=11 // pred_check_branch
          %94 = sbr.rel (%p92) target = $region16
        $region15: #{tpu_custom_call.1} parent=11 // pred_region
          _
        $region16: #{tpu_custom_call.1} parent=11 // pred_fallthru
          _
      $region12: #{tpu_custom_call.1} parent=5 // pred_fallthru
        _
      %p95 = scmp.lt.s32.totalorder %s9, 4
      // Predicated region
      $region17: #{tpu_custom_call.1} parent=5 // pred_check
        %p96 = pneg %p95
      $region18: #{tpu_custom_call.1} parent=5 // pred_check_branch
        %98 = sbr.rel (%p96) target = $region20
      $region19: #{tpu_custom_call.1} parent=5 // pred_region
        // Predicated region
        $region21: #{tpu_custom_call.1} parent=19 // pred_check
          %p99 = pneg %p29
        $region22: #{tpu_custom_call.1} parent=19 // pred_check_branch
          %101 = sbr.rel (%p99) target = $region24
        $region23: #{tpu_custom_call.1} parent=19 // pred_region
          %s102 = smul.u32 32, %s9
          %p103 = scmp.lt.s32.totalorder %s102, 127
          %s104 = scalar_select %p103, %s102, 127
          %s105 = smul.addr %s104, 8
          %s106 = scalar_lea.vmem %s0, %s105
          %s107 = smul.u32 32, %s9
        $region24: #{tpu_custom_call.1} parent=19 // pred_fallthru
          _
      $region20: #{tpu_custom_call.1} parent=5 // pred_fallthru
        _
      %p108 = scmp.le.s32.totalorder 1, %s9
      %p109 = scmp.lt.s32.totalorder %s9, 5
      %p110 = pnand %p108, %p109
      %p111 = pneg %p110
      // Predicated region
      $region25: #{tpu_custom_call.1} parent=5 // pred_check
        _
      $region26: #{tpu_custom_call.1} parent=5 // pred_check_branch
        %113 = sbr.rel (%p110) target = $region28
      $region27: #{tpu_custom_call.1} parent=5 // pred_region
        %s114 = ssub.s32 %s9, 1
        %s115 = smul.u32 32, %s14
        %p116 = scmp.lt.s32.totalorder %s115, 127
        %s117 = scalar_select %p116, %s115, 127
        %s118 = smul.addr %s117, 8
        %s119 = scalar_lea.vmem %s0, %s118
        %p120 = pneg %p35
        %p121 = pneg %p32
        %p122 = pneg %p56
        %p123 = pneg %p53
        %p124 = pneg %p77
        %p125 = pneg %p74
        %s126 = smul.u32 32, %s14
        %p127 = scmp.lt.s32.totalorder %s126, 127
        %s128 = scalar_select %p127, %s126, 127
        %s129 = smul.addr %s128, 8
        %s130 = scalar_lea.vmem %s0, %s129
        %s131 = smul.u32 32, %s14
        %v132 = vld [vmem:[%s130] sm:$0xff]
        %v133 = vld [vmem:[%s130 + $0x8] sm:$0xff]
        %v134 = vld [vmem:[%s130 + $0x10] sm:$0xff]
        %v135 = vld [vmem:[%s130 + $0x18] sm:$0xff]
        %v136 = vld [vmem:[%s130 + $0x20] sm:$0xff]
        %v137 = vld [vmem:[%s130 + $0x28] sm:$0xff]
        %v138 = vld [vmem:[%s130 + $0x30] sm:$0xff]
        %v139 = vld [vmem:[%s130 + $0x38] sm:$0xff]
        %v140 = vld [vmem:[%s130 + $0x40] sm:$0xff]
        %v141 = vld [vmem:[%s130 + $0x48] sm:$0xff]
        %v142 = vld [vmem:[%s130 + $0x50] sm:$0xff]
        %v143 = vld [vmem:[%s130 + $0x58] sm:$0xff]
        %v144 = vld [vmem:[%s130 + $0x60] sm:$0xff]
        %v145 = vld [vmem:[%s130 + $0x68] sm:$0xff]
        %v146 = vld [vmem:[%s130 + $0x70] sm:$0xff]
        %v147 = vld [vmem:[%s130 + $0x78] sm:$0xff]
        %v148 = vld [vmem:[%s130 + $0x80] sm:$0xff]
        %v149 = vld [vmem:[%s130 + $0x88] sm:$0xff]
        %v150 = vld [vmem:[%s130 + $0x90] sm:$0xff]
        %v151 = vld [vmem:[%s130 + $0x98] sm:$0xff]
        %v152 = vld [vmem:[%s130 + $0xa0] sm:$0xff]
        %v153 = vld [vmem:[%s130 + $0xa8] sm:$0xff]
        %v154 = vld [vmem:[%s130 + $0xb0] sm:$0xff]
        %v155 = vld [vmem:[%s130 + $0xb8] sm:$0xff]
        %v156 = vld [vmem:[%s130 + $0xc0] sm:$0xff]
        %v157 = vld [vmem:[%s130 + $0xc8] sm:$0xff]
        %v158 = vld [vmem:[%s130 + $0xd0] sm:$0xff]
        %v159 = vld [vmem:[%s130 + $0xd8] sm:$0xff]
        %v160 = vld [vmem:[%s130 + $0xe0] sm:$0xff]
        %v161 = vld [vmem:[%s130 + $0xe8] sm:$0xff]
        %v162 = vld [vmem:[%s130 + $0xf0] sm:$0xff]
        %v163 = vld [vmem:[%s130 + $0xf8] sm:$0xff]
        %v164 = vld [vmem:[%s1] sm:$0xff]
        %v165 = vld [vmem:[%s1 + $0x8] sm:$0x3]
        %vm166 = vcmask 80896
        %v168 = vsel %vm166, %v132, 0
        %v171 = vsel %vm166, %v133, 0
        %v174 = vsel %vm166, %v134, 0
        %v177 = vsel %vm166, %v135, 0
        %v180 = vsel %vm166, %v136, 0
        %v183 = vsel %vm166, %v137, 0
        %v186 = vsel %vm166, %v138, 0
        %v189 = vsel %vm166, %v139, 0
        %v192 = vsel %vm166, %v140, 0
        %v195 = vsel %vm166, %v141, 0
        %v198 = vsel %vm166, %v142, 0
        %v201 = vsel %vm166, %v143, 0
        %v204 = vsel %vm166, %v144, 0
        %v207 = vsel %vm166, %v145, 0
        %v210 = vsel %vm166, %v146, 0
        %v213 = vsel %vm166, %v147, 0
        %v216 = vsel %vm166, %v148, 0
        %v219 = vsel %vm166, %v149, 0
        %v222 = vsel %vm166, %v150, 0
        %v225 = vsel %vm166, %v151, 0
        %v228 = vsel %vm166, %v152, 0
        %v231 = vsel %vm166, %v153, 0
        %v234 = vsel %vm166, %v154, 0
        %v237 = vsel %vm166, %v155, 0
        %v240 = vsel %vm166, %v156, 0
        %v243 = vsel %vm166, %v157, 0
        %v246 = vsel %vm166, %v158, 0
        %v249 = vsel %vm166, %v159, 0
        %v252 = vsel %vm166, %v160, 0
        %v255 = vsel %vm166, %v161, 0
        %v258 = vsel %vm166, %v162, 0
        %v261 = vsel %vm166, %v163, 0
        %vm263 = vcmask 1041408
        %v265 = vsel %vm263, %v165, 0
        %267 = vmatprep.subr.mxu0 0.0
        %268 = vmatpush1.msra.mxu0 %v164
        %269 = vmatprep.subr.mxu0 0.0
        %270 = vmatpush1.msra.mxu0 %v265
        %271 = vmatprep.subr.mxu0 0.0
        %272 = vmatpush1.msra.mxu0 0.0
        %273 = vmatprep.subr.mxu0 0.0
        %274 = vmatpush1.msra.mxu0 0.0
        %275 = vmatprep.subr.mxu0 0.0
        %276 = vmatpush1.msra.mxu0 0.0
        %277 = vmatprep.subr.mxu0 0.0
        %278 = vmatpush1.msra.mxu0 0.0
        %279 = vmatprep.subr.mxu0 0.0
        %280 = vmatpush1.msra.mxu0 0.0
        %281 = vmatprep.subr.mxu0 0.0
        %282 = vmatpush1.msra.mxu0 0.0
        %283 = vmatprep.subr.mxu0 0.0
        %284 = vmatpush1.msra.mxu0 0.0
        %285 = vmatprep.subr.mxu0 0.0
        %286 = vmatpush1.msra.mxu0 0.0
        %287 = vmatprep.subr.mxu0 0.0
        %288 = vmatpush1.msra.mxu0 0.0
        %289 = vmatprep.subr.mxu0 0.0
        %290 = vmatpush1.msra.mxu0 0.0
        %291 = vmatprep.subr.mxu0 0.0
        %292 = vmatpush1.msra.mxu0 0.0
        %293 = vmatprep.subr.mxu0 0.0
        %294 = vmatpush1.msra.mxu0 0.0
        %295 = vmatprep.subr.mxu0 0.0
        %296 = vmatpush1.msra.mxu0 0.0
        %297 = vmatprep.subr.mxu0 0.0
        %298 = vmatpush1.msra.mxu0 0.0
        %299 = vmatprep.subr.mxu0 0.0
        %300 = vmatpush1.msra.mxu0 0.0
        %301 = vmatprep.subr.mxu0 0.0
        %302 = vmatpush1.msra.mxu0 0.0
        %303 = vmatprep.subr.mxu0 0.0
        %304 = vmatpush1.msra.mxu0 0.0
        %305 = vmatprep.subr.mxu0 0.0
        %306 = vmatpush1.msra.mxu0 0.0
        %307 = vmatprep.subr.mxu0 0.0
        %308 = vmatpush1.msra.mxu0 0.0
        %309 = vmatprep.subr.mxu0 0.0
        %310 = vmatpush1.msra.mxu0 0.0
        %311 = vmatprep.subr.mxu0 0.0
        %312 = vmatpush1.msra.mxu0 0.0
        %313 = vmatprep.subr.mxu0 0.0
        %314 = vmatpush1.msra.mxu0 0.0
        %315 = vmatprep.subr.mxu0 0.0
        %316 = vmatpush1.msra.mxu0 0.0
        %317 = vmatprep.subr.mxu0 0.0
        %318 = vmatpush1.msra.mxu0 0.0
        %319 = vmatprep.subr.mxu0 0.0
        %320 = vmatpush1.msra.mxu0 0.0
        %321 = vmatprep.subr.mxu0 0.0
        %322 = vmatpush1.msra.mxu0 0.0
        %323 = vmatprep.subr.mxu0 0.0
        %324 = vmatpush1.msra.mxu0 0.0
        %325 = vmatprep.subr.mxu0 0.0
        %326 = vmatpush1.msra.mxu0 0.0
        %327 = vmatprep.subr.mxu0 0.0
        %328 = vmatpush1.msra.mxu0 0.0
        %329 = vmatprep.subr.mxu0 0.0
        %330 = vmatpush1.msra.mxu0 0.0
        %331 = vmatprep.mubr.f32.mxu0 0.0
        %332 = vmatmul.mubr.f32.gmra.mrb[0].mxu0 %v168
        %v333 = vpop.f32.mrb[0].mxu0
        %v334 = vadd.f32 0.0, %v333
        %v335 = vpop.f32.mrb[0].mxu0
        %336 = vmatprep.mubr.f32.mxu0 0.0
        %337 = vmatmul.mubr.f32.gmra.mrb[0].mxu0 %v171
        %v338 = vpop.f32.mrb[0].mxu0
        %v339 = vadd.f32 0.0, %v338
        %v340 = vpop.f32.mrb[0].mxu0
        %341 = vmatprep.mubr.f32.mxu0 0.0
        %342 = vmatmul.mubr.f32.gmra.mrb[0].mxu0 %v174
        %v343 = vpop.f32.mrb[0].mxu0
        %v344 = vadd.f32 0.0, %v343
        %v345 = vpop.f32.mrb[0].mxu0
        %346 = vmatprep.mubr.f32.mxu0 0.0
        %347 = vmatmul.mubr.f32.gmra.mrb[0].mxu0 %v177
        %v348 = vpop.f32.mrb[0].mxu0
        %v349 = vadd.f32 0.0, %v348
        %v350 = vpop.f32.mrb[0].mxu0
        %351 = vmatprep.mubr.f32.mxu0 0.0
        %352 = vmatmul.mubr.f32.gmra.mrb[0].mxu0 %v180
        %v353 = vpop.f32.mrb[0].mxu0
        %v354 = vadd.f32 0.0, %v353
        %v355 = vpop.f32.mrb[0].mxu0
        %356 = vmatprep.mubr.f32.mxu0 0.0
        %357 = vmatmul.mubr.f32.gmra.mrb[0].mxu0 %v183
        %v358 = vpop.f32.mrb[0].mxu0
        %v359 = vadd.f32 0.0, %v358
        %v360 = vpop.f32.mrb[0].mxu0
        %361 = vmatprep.mubr.f32.mxu0 0.0
        %362 = vmatmul.mubr.f32.gmra.mrb[0].mxu0 %v186
        %v363 = vpop.f32.mrb[0].mxu0
        %v364 = vadd.f32 0.0, %v363
        %v365 = vpop.f32.mrb[0].mxu0
        %366 = vmatprep.mubr.f32.mxu0 0.0
        %367 = vmatmul.mubr.f32.gmra.mrb[0].mxu0 %v189
        %v368 = vpop.f32.mrb[0].mxu0
        %v369 = vadd.f32 0.0, %v368
        %v370 = vpop.f32.mrb[0].mxu0
        %371 = vmatprep.mubr.f32.mxu0 0.0
        %372 = vmatmul.mubr.f32.gmra.mrb[0].mxu0 %v192
        %v373 = vpop.f32.mrb[0].mxu0
        %v374 = vadd.f32 0.0, %v373
        %v375 = vpop.f32.mrb[0].mxu0
        %376 = vmatprep.mubr.f32.mxu0 0.0
        %377 = vmatmul.mubr.f32.gmra.mrb[0].mxu0 %v195
        %v378 = vpop.f32.mrb[0].mxu0
        %v379 = vadd.f32 0.0, %v378
        %v380 = vpop.f32.mrb[0].mxu0
        %381 = vmatprep.mubr.f32.mxu0 0.0
        %382 = vmatmul.mubr.f32.gmra.mrb[0].mxu0 %v198
        %v383 = vpop.f32.mrb[0].mxu0
        %v384 = vadd.f32 0.0, %v383
        %v385 = vpop.f32.mrb[0].mxu0
        %386 = vmatprep.mubr.f32.mxu0 0.0
        %387 = vmatmul.mubr.f32.gmra.mrb[0].mxu0 %v201
        %v388 = vpop.f32.mrb[0].mxu0
        %v389 = vadd.f32 0.0, %v388
        %v390 = vpop.f32.mrb[0].mxu0
        %391 = vmatprep.mubr.f32.mxu0 0.0
        %392 = vmatmul.mubr.f32.gmra.mrb[0].mxu0 %v204
        %v393 = vpop.f32.mrb[0].mxu0
        %v394 = vadd.f32 0.0, %v393
        %v395 = vpop.f32.mrb[0].mxu0
        %396 = vmatprep.mubr.f32.mxu0 0.0
        %397 = vmatmul.mubr.f32.gmra.mrb[0].mxu0 %v207
        %v398 = vpop.f32.mrb[0].mxu0
        %v399 = vadd.f32 0.0, %v398
        %v400 = vpop.f32.mrb[0].mxu0
        %401 = vmatprep.mubr.f32.mxu0 0.0
        %402 = vmatmul.mubr.f32.gmra.mrb[0].mxu0 %v210
        %v403 = vpop.f32.mrb[0].mxu0
        %v404 = vadd.f32 0.0, %v403
        %v405 = vpop.f32.mrb[0].mxu0
        %406 = vmatprep.mubr.f32.mxu0 0.0
        %407 = vmatmul.mubr.f32.gmra.mrb[0].mxu0 %v213
        %v408 = vpop.f32.mrb[0].mxu0
        %v409 = vadd.f32 0.0, %v408
        %v410 = vpop.f32.mrb[0].mxu0
        %411 = vmatprep.mubr.f32.mxu0 0.0
        %412 = vmatmul.mubr.f32.gmra.mrb[0].mxu0 %v216
        %v413 = vpop.f32.mrb[0].mxu0
        %v414 = vadd.f32 0.0, %v413
        %v415 = vpop.f32.mrb[0].mxu0
        %416 = vmatprep.mubr.f32.mxu0 0.0
        %417 = vmatmul.mubr.f32.gmra.mrb[0].mxu0 %v219
        %v418 = vpop.f32.mrb[0].mxu0
        %v419 = vadd.f32 0.0, %v418
        %v420 = vpop.f32.mrb[0].mxu0
        %421 = vmatprep.mubr.f32.mxu0 0.0
        %422 = vmatmul.mubr.f32.gmra.mrb[0].mxu0 %v222
        %v423 = vpop.f32.mrb[0].mxu0
        %v424 = vadd.f32 0.0, %v423
        %v425 = vpop.f32.mrb[0].mxu0
        %426 = vmatprep.mubr.f32.mxu0 0.0
        %427 = vmatmul.mubr.f32.gmra.mrb[0].mxu0 %v225
        %v428 = vpop.f32.mrb[0].mxu0
        %v429 = vadd.f32 0.0, %v428
        %v430 = vpop.f32.mrb[0].mxu0
        %431 = vmatprep.mubr.f32.mxu0 0.0
        %432 = vmatmul.mubr.f32.gmra.mrb[0].mxu0 %v228
        %v433 = vpop.f32.mrb[0].mxu0
        %v434 = vadd.f32 0.0, %v433
        %v435 = vpop.f32.mrb[0].mxu0
        %436 = vmatprep.mubr.f32.mxu0 0.0
        %437 = vmatmul.mubr.f32.gmra.mrb[0].mxu0 %v231
        %v438 = vpop.f32.mrb[0].mxu0
        %v439 = vadd.f32 0.0, %v438
        %v440 = vpop.f32.mrb[0].mxu0
        %441 = vmatprep.mubr.f32.mxu0 0.0
        %442 = vmatmul.mubr.f32.gmra.mrb[0].mxu0 %v234
        %v443 = vpop.f32.mrb[0].mxu0
        %v444 = vadd.f32 0.0, %v443
        %v445 = vpop.f32.mrb[0].mxu0
        %446 = vmatprep.mubr.f32.mxu0 0.0
        %447 = vmatmul.mubr.f32.gmra.mrb[0].mxu0 %v237
        %v448 = vpop.f32.mrb[0].mxu0
        %v449 = vadd.f32 0.0, %v448
        %v450 = vpop.f32.mrb[0].mxu0
        %451 = vmatprep.mubr.f32.mxu0 0.0
        %452 = vmatmul.mubr.f32.gmra.mrb[0].mxu0 %v240
        %v453 = vpop.f32.mrb[0].mxu0
        %v454 = vadd.f32 0.0, %v453
        %v455 = vpop.f32.mrb[0].mxu0
        %456 = vmatprep.mubr.f32.mxu0 0.0
        %457 = vmatmul.mubr.f32.gmra.mrb[0].mxu0 %v243
        %v458 = vpop.f32.mrb[0].mxu0
        %v459 = vadd.f32 0.0, %v458
        %v460 = vpop.f32.mrb[0].mxu0
        %461 = vmatprep.mubr.f32.mxu0 0.0
        %462 = vmatmul.mubr.f32.gmra.mrb[0].mxu0 %v246
        %v463 = vpop.f32.mrb[0].mxu0
        %v464 = vadd.f32 0.0, %v463
        %v465 = vpop.f32.mrb[0].mxu0
        %466 = vmatprep.mubr.f32.mxu0 0.0
        %467 = vmatmul.mubr.f32.gmra.mrb[0].mxu0 %v249
        %v468 = vpop.f32.mrb[0].mxu0
        %v469 = vadd.f32 0.0, %v468
        %v470 = vpop.f32.mrb[0].mxu0
        %471 = vmatprep.mubr.f32.mxu0 0.0
        %472 = vmatmul.mubr.f32.gmra.mrb[0].mxu0 %v252
        %v473 = vpop.f32.mrb[0].mxu0
        %v474 = vadd.f32 0.0, %v473
        %v475 = vpop.f32.mrb[0].mxu0
        %476 = vmatprep.mubr.f32.mxu0 0.0
        %477 = vmatmul.mubr.f32.gmra.mrb[0].mxu0 %v255
        %v478 = vpop.f32.mrb[0].mxu0
        %v479 = vadd.f32 0.0, %v478
        %v480 = vpop.f32.mrb[0].mxu0
        %481 = vmatprep.mubr.f32.mxu0 0.0
        %482 = vmatmul.mubr.f32.gmra.mrb[0].mxu0 %v258
        %v483 = vpop.f32.mrb[0].mxu0
        %v484 = vadd.f32 0.0, %v483
        %v485 = vpop.f32.mrb[0].mxu0
        %486 = vmatprep.mubr.f32.mxu0 0.0
        %487 = vmatmul.mubr.f32.gmra.mrb[0].mxu0 %v261
        %v488 = vpop.f32.mrb[0].mxu0
        %v489 = vadd.f32 0.0, %v488
        %v490 = vpop.f32.mrb[0].mxu0
        %491 = vdwg.mxu0
        %p492 = scmp.eq.s32.totalorder %s14, 0
        // Predicated region
        $region29: #{tpu_custom_call.1} parent=27 // pred_check
          %p493 = pneg %p492
        $region30: #{tpu_custom_call.1} parent=27 // pred_check_branch
          %495 = sbr.rel (%p493) target = $region32
        $region31: #{tpu_custom_call.1} parent=27 // pred_region
          %496 = vst [vmem:[#allocation2] sm:$0x3] 0.0
        $region32: #{tpu_custom_call.1} parent=27 // pred_fallthru
          _
        %v497 = vadd.f32 %v334, %v339
        %v498 = vadd.f32 %v497, %v344
        %v499 = vadd.f32 %v498, %v349
        %v500 = vadd.f32 %v499, %v354
        %v501 = vadd.f32 %v500, %v359
        %v502 = vadd.f32 %v501, %v364
        %v503 = vadd.f32 %v502, %v369
        %v504 = vadd.f32 %v503, %v374
        %v505 = vadd.f32 %v504, %v379
        %v506 = vadd.f32 %v505, %v384
        %v507 = vadd.f32 %v506, %v389
        %v508 = vadd.f32 %v507, %v394
        %v509 = vadd.f32 %v508, %v399
        %v510 = vadd.f32 %v509, %v404
        %v511 = vadd.f32 %v510, %v409
        %v512 = vadd.f32 %v511, %v414
        %v513 = vadd.f32 %v512, %v419
        %v514 = vadd.f32 %v513, %v424
        %v515 = vadd.f32 %v514, %v429
        %v516 = vadd.f32 %v515, %v434
        %v517 = vadd.f32 %v516, %v439
        %v518 = vadd.f32 %v517, %v444
        %v519 = vadd.f32 %v518, %v449
        %v520 = vadd.f32 %v519, %v454
        %v521 = vadd.f32 %v520, %v459
        %v522 = vadd.f32 %v521, %v464
        %v523 = vadd.f32 %v522, %v469
        %v524 = vadd.f32 %v523, %v474
        %v525 = vadd.f32 %v524, %v479
        %v526 = vadd.f32 %v525, %v484
        %v527 = vadd.f32 %v526, %v489
        %v528 = vrot.slane %v527, 4
        %v529 = vadd.f32 %v527, %v528
        %v530 = vrot.slane %v529, 2
        %v531 = vadd.f32 %v529, %v530
        %v532 = vrot.slane %v531, 1
        %v533 = vadd.f32 %v531, %v532
        %v534 = vmul.f32 %v334, %v334
        %v535 = vmul.f32 %v339, %v339
        %v536 = vmul.f32 %v344, %v344
        %v537 = vmul.f32 %v349, %v349
        %v538 = vmul.f32 %v354, %v354
        %v539 = vmul.f32 %v359, %v359
        %v540 = vmul.f32 %v364, %v364
        %v541 = vmul.f32 %v369, %v369
        %v542 = vmul.f32 %v374, %v374
        %v543 = vmul.f32 %v379, %v379
        %v544 = vmul.f32 %v384, %v384
        %v545 = vmul.f32 %v389, %v389
        %v546 = vmul.f32 %v394, %v394
        %v547 = vmul.f32 %v399, %v399
        %v548 = vmul.f32 %v404, %v404
        %v549 = vmul.f32 %v409, %v409
        %v550 = vmul.f32 %v414, %v414
        %v551 = vmul.f32 %v419, %v419
        %v552 = vmul.f32 %v424, %v424
        %v553 = vmul.f32 %v429, %v429
        %v554 = vmul.f32 %v434, %v434
        %v555 = vmul.f32 %v439, %v439
        %v556 = vmul.f32 %v444, %v444
        %v557 = vmul.f32 %v449, %v449
        %v558 = vmul.f32 %v454, %v454
        %v559 = vmul.f32 %v459, %v459
        %v560 = vmul.f32 %v464, %v464
        %v561 = vmul.f32 %v469, %v469
        %v562 = vmul.f32 %v474, %v474
        %v563 = vmul.f32 %v479, %v479
        %v564 = vmul.f32 %v484, %v484
        %v565 = vmul.f32 %v489, %v489
        %v566 = vadd.f32 %v534, %v535
        %v567 = vadd.f32 %v566, %v536
        %v568 = vadd.f32 %v567, %v537
        %v569 = vadd.f32 %v568, %v538
        %v570 = vadd.f32 %v569, %v539
        %v571 = vadd.f32 %v570, %v540
        %v572 = vadd.f32 %v571, %v541
        %v573 = vadd.f32 %v572, %v542
        %v574 = vadd.f32 %v573, %v543
        %v575 = vadd.f32 %v574, %v544
        %v576 = vadd.f32 %v575, %v545
        %v577 = vadd.f32 %v576, %v546
        %v578 = vadd.f32 %v577, %v547
        %v579 = vadd.f32 %v578, %v548
        %v580 = vadd.f32 %v579, %v549
        %v581 = vadd.f32 %v580, %v550
        %v582 = vadd.f32 %v581, %v551
        %v583 = vadd.f32 %v582, %v552
        %v584 = vadd.f32 %v583, %v553
        %v585 = vadd.f32 %v584, %v554
        %v586 = vadd.f32 %v585, %v555
        %v587 = vadd.f32 %v586, %v556
        %v588 = vadd.f32 %v587, %v557
        %v589 = vadd.f32 %v588, %v558
        %v590 = vadd.f32 %v589, %v559
        %v591 = vadd.f32 %v590, %v560
        %v592 = vadd.f32 %v591, %v561
        %v593 = vadd.f32 %v592, %v562
        %v594 = vadd.f32 %v593, %v563
        %v595 = vadd.f32 %v594, %v564
        %v596 = vadd.f32 %v595, %v565
        %v597 = vrot.slane %v596, 4
        %v598 = vadd.f32 %v596, %v597
        %v599 = vrot.slane %v598, 2
        %v600 = vadd.f32 %v598, %v599
        %v601 = vrot.slane %v600, 1
        %v602 = vadd.f32 %v600, %v601
        %vm603 = vcmask 1040384
        %v604 = vsel %vm603, %v533, %v602
        %v605 = vld [vmem:[#allocation2] sm:$0x3]
        %v606 = vadd.f32 %v605, %v604
        %607 = vst [vmem:[#allocation2] sm:$0x3] %v606
        // Predicated region
        $region33: #{tpu_custom_call.1} parent=27 // pred_check
          %p608 = pneg %p74
        $region34: #{tpu_custom_call.1} parent=27 // pred_check_branch
          %610 = sbr.rel (%p608) target = $region36
        $region35: #{tpu_custom_call.1} parent=27 // pred_region
          %s612 = ssub.s32 32, 32
          %613 = vsyncadd [#allocation3], %s612
          %s615 = sshll.u32 [#allocation2], 4
          %s616 = int_to_ptr.vmem [resolvable:$true] %s615
          %618 = dma.vmem_to_hbm [thread:$0]  %s616, 32, %s2, [#allocation3]
        $region36: #{tpu_custom_call.1} parent=27 // pred_fallthru
          _
        // Predicated region
        $region37: #{tpu_custom_call.1} parent=27 // pred_check
          %p619 = pneg %p74
        $region38: #{tpu_custom_call.1} parent=27 // pred_check_branch
          %621 = sbr.rel (%p619) target = $region40
        $region39: #{tpu_custom_call.1} parent=27 // pred_region
          %622 = dma.done [#allocation3], 32
        $region40: #{tpu_custom_call.1} parent=27 // pred_fallthru
          _
      $region28: #{tpu_custom_call.1} parent=5 // pred_fallthru
        _
      %p623 = scmp.le.s32.totalorder 2, %s9
      // Predicated region
      $region41: #{tpu_custom_call.1} parent=5 // pred_check
        %p624 = pneg %p623
      $region42: #{tpu_custom_call.1} parent=5 // pred_check_branch
        %626 = sbr.rel (%p624) target = $region44
      $region43: #{tpu_custom_call.1} parent=5 // pred_region
        %s627 = ssub.s32 %s9, 2
      $region44: #{tpu_custom_call.1} parent=5 // pred_fallthru
        _
    $region6: #{tpu_custom_call.1} parent=1 // loop_footer
      %s13 = sadd.s32 1, %s9
    $region7: #{tpu_custom_call.1} parent=1 // loop_footer_branch
      %8 = sbr.rel target = $region3
    $region8: #{tpu_custom_call.1} parent=1 // loop_exit
      _
    %628 = vsyncpa [#allocation3], 1
    %s629 = scalar_lea.sflag [#allocation3], 1
    %630 = vsyncpa %s629, 1

</llo_original>
